<compile_context>
chip_gen: v7x
topology: tpu7x:2x2x1
jax: 0.10.0
libtpu: 0.0.40
codegen_flags: <defaults>
</compile_context>

<pallas_src>
import functools

import jax
import jax.numpy as jnp
from jax.experimental import pallas as pl
from jax.experimental.pallas import tpu as pltpu

P_DROP = 0.5  # MC-dropout probability (always applied, even at "eval")


def _round_up(n, m):
    return ((n + m - 1) // m) * m


def _pad_axis_to(a, axis, target):
    pad = target - a.shape[axis]
    if pad <= 0:
        return a
    widths = [(0, 0)] * a.ndim
    widths[axis] = (0, pad)
    return jnp.pad(a, widths)


def _keep_mask(shape, seed_u, samp_u, keep_threshold):
    """Stateless counter-based dropout-keep mask (murmur3 finalizer).

    Keyed on (seed, MC-sample index, element position).  Pure jnp integer ops so
    it lowers identically inside the Pallas kernel and in the plain-JAX reference.
    """
    rows = jax.lax.broadcasted_iota(jnp.int32, shape, 0).astype(jnp.uint32)
    cols = jax.lax.broadcasted_iota(jnp.int32, shape, 1).astype(jnp.uint32)
    z = (rows * jnp.uint32(shape[1]) + cols
         + samp_u * jnp.uint32(0x85EBCA6B)
         + seed_u * jnp.uint32(0x9E3779B9))
    z = (z ^ (z >> 16)) * jnp.uint32(0x7FEB352D)
    z = (z ^ (z >> 15)) * jnp.uint32(0x846CA68B)
    z = z ^ (z >> 16)
    return z < jnp.uint32(keep_threshold)


def _mc_mlp_kernel(keep_threshold, seed_ref,
                   x_ref, w1_ref, b1_ref, w2_ref, b2_ref, o_ref):
    # Linear 1 on the MXU: bf16 operands, f32 accumulation.  Bias/ReLU in f32.
    h = jnp.dot(x_ref[...], w1_ref[...], preferred_element_type=jnp.float32)
    h = jnp.maximum(h + b1_ref[...], 0.0)

    # MC dropout (always active — this is the "patched" BayesianModule behavior).
    # One uint32 threshold compare per element; the 1/(1-p) rescale is pre-folded
    # into W2 in the wrapper, so this is a pure select.
    seed_u = seed_ref[0].astype(jnp.uint32)
    samp_u = pl.program_id(0).astype(jnp.uint32)   # different mask per MC sample
    keep = _keep_mask(h.shape, seed_u, samp_u, keep_threshold)
    h = jnp.where(keep, h, 0.0)

    # Linear 2 on the MXU (bf16 operands, f32 accumulation) + bias.
    y = jnp.dot(h.astype(w2_ref.dtype), w2_ref[...],
                preferred_element_type=jnp.float32) + b2_ref[...]
    o_ref[...] = y[None].astype(o_ref.dtype)


@functools.partial(jax.jit, static_argnames=("n_mc", "out_f", "keep_threshold"))
def bayesian_module_forward(seed, x, w1, b1, w2, b2, *, n_mc, out_f, keep_threshold):
    """n_mc MC-dropout forward samples of the patched MLP, one pallas_call."""
    batch = x.shape[0]
    in_p, hid_p = w1.shape
    out_p = w2.shape[1]
    bp = _round_up(batch, 8)

    # Pad x to the (already padded) weight layout; cast MXU operand to bf16.
    xp = _pad_axis_to(_pad_axis_to(x.astype(jnp.float32), 1, in_p), 0, bp)
    xp = xp.astype(jnp.bfloat16)

    kernel = functools.partial(_mc_mlp_kernel, keep_threshold)
    grid_spec = pltpu.PrefetchScalarGridSpec(
        num_scalar_prefetch=1,
        grid=(n_mc,),  # one MC-dropout sample per grid step
        in_specs=[
            # constant block index -> x / weights stay VMEM-resident across samples
            pl.BlockSpec((bp, in_p), lambda s, seed_ref: (0, 0)),
            pl.BlockSpec((in_p, hid_p), lambda s, seed_ref: (0, 0)),
            pl.BlockSpec((1, hid_p), lambda s, seed_ref: (0, 0)),
            pl.BlockSpec((hid_p, out_p), lambda s, seed_ref: (0, 0)),
            pl.BlockSpec((1, out_p), lambda s, seed_ref: (0, 0)),
        ],
        out_specs=pl.BlockSpec((1, bp, out_p), lambda s, seed_ref: (s, 0, 0)),
    )

    out = pl.pallas_call(
        kernel,
        out_shape=jax.ShapeDtypeStruct((n_mc, bp, out_p), jnp.float32),
        grid_spec=grid_spec,
        compiler_params=pltpu.CompilerParams(
            # "parallel": sample axis shards across v7x's 2 TCs; neutral on v5e/v6e.
            dimension_semantics=("parallel",),
        ),
    )(seed, xp, w1, b1, w2, b2)

    return out[:, :batch, :out_f]


class BayesianModulePallas:
    """Mirror of baal's BayesianModule, instantiated as the concrete MC-dropout
    case.  __init__ is the "patching_function": it makes dropout always-on, folds
    the 1/(1-p) rescale into W2, pads matmul dims to multiples of 128, and casts
    MXU operands to bf16.  __call__ (forward) delegates to the patched module."""

    def __init__(self, params, p_drop=P_DROP):
        self._orig_params = params           # kept so unpatch() can restore them
        self.p_drop = float(p_drop)
        w1, b1, w2, b2 = params

        self.in_f = w1.shape[0]
        self.out_f = w2.shape[1]
        hidden = w1.shape[1]
        in_p = _round_up(self.in_f, 128)
        hid_p = _round_up(hidden, 128)
        out_p = _round_up(self.out_f, 128)

        scale = 1.0 / (1.0 - self.p_drop)
        self.w1 = _pad_axis_to(_pad_axis_to(jnp.asarray(w1, jnp.float32), 0, in_p),
                               1, hid_p).astype(jnp.bfloat16)
        self.b1 = _pad_axis_to(jnp.asarray(b1, jnp.float32), 1, hid_p)
        self.w2 = _pad_axis_to(_pad_axis_to(jnp.asarray(w2, jnp.float32) * scale,
                                            0, hid_p), 1, out_p).astype(jnp.bfloat16)
        self.b2 = _pad_axis_to(jnp.asarray(b2, jnp.float32), 1, out_p)

        # keep iff hashed_uint32 < (1-p) * 2^32
        self.keep_threshold = min(int(round((1.0 - self.p_drop) * 2 ** 32)),
                                  2 ** 32 - 1)

    def __call__(self, x, seed, n_mc=4):
        return bayesian_module_forward(
            seed, x, self.w1, self.b1, self.w2, self.b2,
            n_mc=int(n_mc), out_f=self.out_f, keep_threshold=self.keep_threshold)

    def unpatch(self):
        # TODO(synk): baal's unpatch_function restores eval-time-off dropout on the
        # wrapped torch module; for a stateless kernel we just return the originals.
        return self._orig_params


def _reference_forward(module, x, seed, n_mc):
    """Plain-JAX reference reproducing the kernel math (padding, bf16 dots, mask)."""
    bp = _round_up(x.shape[0], 8)
    xp = _pad_axis_to(_pad_axis_to(x.astype(jnp.float32), 1, module.w1.shape[0]),
                      0, bp).astype(jnp.bfloat16)
    h = jnp.dot(xp, module.w1, preferred_element_type=jnp.float32)
    h = jnp.maximum(h + module.b1, 0.0)
    seed_u = seed[0].astype(jnp.uint32)
    ys = []
    for s in range(n_mc):
        keep = _keep_mask(h.shape, seed_u, jnp.uint32(s), module.keep_threshold)
        hd = jnp.where(keep, h, 0.0)
        ys.append(jnp.dot(hd.astype(module.w2.dtype), module.w2,
                          preferred_element_type=jnp.float32) + module.b2)
    y = jnp.stack(ys)
    return y[:, :x.shape[0], :module.out_f]


if __name__ == "__main__":
    key = jax.random.PRNGKey(0)
    k_x, k_w1, k_b1, k_w2, k_b2 = jax.random.split(key, 5)

    batch, in_f, hidden, out_f = 8, 32, 128, 16
    n_mc = 4

    x = jax.random.normal(k_x, (batch, in_f), dtype=jnp.float32)
    w1 = jax.random.normal(k_w1, (in_f, hidden), dtype=jnp.float32) * 0.1
    b1 = jax.random.normal(k_b1, (1, hidden), dtype=jnp.float32) * 0.1
    w2 = jax.random.normal(k_w2, (hidden, out_f), dtype=jnp.float32) * 0.1
    b2 = jax.random.normal(k_b2, (1, out_f), dtype=jnp.float32) * 0.1

    seed = jnp.array([1234], dtype=jnp.int32)

    module = BayesianModulePallas((w1, b1, w2, b2), p_drop=P_DROP)
    y = module(x, seed, n_mc=n_mc)
    jax.block_until_ready(y)

    assert y.shape == (n_mc, batch, out_f)
    assert bool(jnp.all(jnp.isfinite(y)))
    # MC samples must differ (different dropout mask per grid step).
    assert not bool(jnp.allclose(y[0], y[1]))
    # Numerical check against a plain-JAX reference of the same patched math.
    y_ref = _reference_forward(module, x, seed, n_mc)
    assert bool(jnp.allclose(y, y_ref, rtol=5e-2, atol=5e-2))

    print("KERNEL_OK")
</pallas_src>

<mosaic_0001>
module attributes {stable_mosaic.version = 11 : i64} {
  func.func @_mc_mlp_kernel(%arg0: i32, %arg1: memref<1xi32, #tpu.memory_space<smem>>, %arg2: memref<8x128xbf16, #tpu.memory_space<vmem>>, %arg3: memref<128x128xbf16, #tpu.memory_space<vmem>>, %arg4: memref<1x128xf32, #tpu.memory_space<vmem>>, %arg5: memref<128x128xbf16, #tpu.memory_space<vmem>>, %arg6: memref<1x128xf32, #tpu.memory_space<vmem>>, %arg7: memref<1x8x128xf32, #tpu.memory_space<vmem>>) attributes {dimension_semantics = [#tpu.dimension_semantics<parallel>], iteration_bounds = array<i64: 4>, scalar_prefetch = 1 : i64, scratch_operands = 0 : i64, tpu.core_type = #tpu.core_type<tc>, window_params = [{pipeline_mode = #tpu.pipeline_mode<synchronous>, transform_indices = @transform_0, window_bounds = array<i64: 8, 128>}, {pipeline_mode = #tpu.pipeline_mode<synchronous>, transform_indices = @transform_1, window_bounds = array<i64: 128, 128>}, {pipeline_mode = #tpu.pipeline_mode<synchronous>, transform_indices = @transform_2, window_bounds = array<i64: 1, 128>}, {pipeline_mode = #tpu.pipeline_mode<synchronous>, transform_indices = @transform_3, window_bounds = array<i64: 128, 128>}, {pipeline_mode = #tpu.pipeline_mode<synchronous>, transform_indices = @transform_4, window_bounds = array<i64: 1, 128>}, {transform_indices = @transform_5, window_bounds = array<i64: 1, 8, 128>}]} {
    %c0 = arith.constant 0 : index
    %c0_0 = arith.constant 0 : index
    %0 = vector.load %arg2[%c0, %c0_0] : memref<8x128xbf16, #tpu.memory_space<vmem>>, vector<8x128xbf16>
    %c0_1 = arith.constant 0 : index
    %c0_2 = arith.constant 0 : index
    %1 = vector.load %arg3[%c0_1, %c0_2] : memref<128x128xbf16, #tpu.memory_space<vmem>>, vector<128x128xbf16>
    %cst = arith.constant dense<0.000000e+00> : vector<8x128xf32>
    %2 = tpu.matmul %0, %1, %cst {dimension_numbers = #tpu.dot_dimension_numbers<[1], [0], [0], [1], [0, 0, 1, 1], [], []>} : vector<8x128xbf16>, vector<128x128xbf16>, vector<8x128xf32> -> vector<8x128xf32>
    %c0_3 = arith.constant 0 : index
    %c0_4 = arith.constant 0 : index
    %3 = vector.load %arg4[%c0_3, %c0_4] : memref<1x128xf32, #tpu.memory_space<vmem>>, vector<1x128xf32>
    %4 = vector.broadcast %3 : vector<1x128xf32> to vector<8x128xf32>
    %5 = arith.addf %2, %4 : vector<8x128xf32>
    %cst_5 = arith.constant 0.000000e+00 : f32
    %6 = vector.broadcast %cst_5 : f32 to vector<8x128xf32>
    %7 = arith.maximumf %5, %6 : vector<8x128xf32>
    %c0_6 = arith.constant 0 : index
    %8 = memref.load %arg1[%c0_6] : memref<1xi32, #tpu.memory_space<smem>>
    %9 = tpu.iota {dimensions = array<i32: 0>} : vector<8x128xi32>
    %10 = tpu.iota {dimensions = array<i32: 1>} : vector<8x128xi32>
    %c128_i32 = arith.constant 128 : i32
    %11 = vector.broadcast %c128_i32 : i32 to vector<8x128xi32>
    %12 = arith.muli %9, %11 : vector<8x128xi32>
    %13 = arith.addi %12, %10 : vector<8x128xi32>
    %c-2048144789_i32 = arith.constant -2048144789 : i32
    %14 = arith.muli %arg0, %c-2048144789_i32 : i32
    %15 = vector.broadcast %14 : i32 to vector<8x128xi32>
    %16 = arith.addi %13, %15 : vector<8x128xi32>
    %c-1640531527_i32 = arith.constant -1640531527 : i32
    %17 = arith.muli %8, %c-1640531527_i32 : i32
    %18 = vector.broadcast %17 : i32 to vector<8x128xi32>
    %19 = arith.addi %16, %18 : vector<8x128xi32>
    %c16_i32 = arith.constant 16 : i32
    %20 = vector.broadcast %c16_i32 : i32 to vector<8x128xi32>
    %21 = arith.shrui %19, %20 : vector<8x128xi32>
    %22 = arith.xori %19, %21 : vector<8x128xi32>
    %c2146121005_i32 = arith.constant 2146121005 : i32
    %23 = vector.broadcast %c2146121005_i32 : i32 to vector<8x128xi32>
    %24 = arith.muli %22, %23 : vector<8x128xi32>
    %c15_i32 = arith.constant 15 : i32
    %25 = vector.broadcast %c15_i32 : i32 to vector<8x128xi32>
    %26 = arith.shrui %24, %25 : vector<8x128xi32>
    %27 = arith.xori %24, %26 : vector<8x128xi32>
    %c-2073254261_i32 = arith.constant -2073254261 : i32
    %28 = vector.broadcast %c-2073254261_i32 : i32 to vector<8x128xi32>
    %29 = arith.muli %27, %28 : vector<8x128xi32>
    %c16_i32_7 = arith.constant 16 : i32
    %30 = vector.broadcast %c16_i32_7 : i32 to vector<8x128xi32>
    %31 = arith.shrui %29, %30 : vector<8x128xi32>
    %32 = arith.xori %29, %31 : vector<8x128xi32>
    %c-2147483648_i32 = arith.constant -2147483648 : i32
    %33 = vector.broadcast %c-2147483648_i32 : i32 to vector<8x128xi32>
    %34 = arith.cmpi ult, %32, %33 : vector<8x128xi32>
    %cst_8 = arith.constant 0.000000e+00 : f32
    %35 = vector.broadcast %cst_8 : f32 to vector<8x128xf32>
    %36 = arith.select %34, %7, %35 : vector<8x128xi1>, vector<8x128xf32>
    %37 = arith.truncf %36 : vector<8x128xf32> to vector<8x128xbf16>
    %c0_9 = arith.constant 0 : index
    %c0_10 = arith.constant 0 : index
    %38 = vector.load %arg5[%c0_9, %c0_10] : memref<128x128xbf16, #tpu.memory_space<vmem>>, vector<128x128xbf16>
    %cst_11 = arith.constant dense<0.000000e+00> : vector<8x128xf32>
    %39 = tpu.matmul %37, %38, %cst_11 {dimension_numbers = #tpu.dot_dimension_numbers<[1], [0], [0], [1], [0, 0, 1, 1], [], []>} : vector<8x128xbf16>, vector<128x128xbf16>, vector<8x128xf32> -> vector<8x128xf32>
    %c0_12 = arith.constant 0 : index
    %c0_13 = arith.constant 0 : index
    %40 = vector.load %arg6[%c0_12, %c0_13] : memref<1x128xf32, #tpu.memory_space<vmem>>, vector<1x128xf32>
    %41 = vector.broadcast %40 : vector<1x128xf32> to vector<8x128xf32>
    %42 = arith.addf %39, %41 : vector<8x128xf32>
    %43 = vector.shape_cast %42 : vector<8x128xf32> to vector<1x8x128xf32>
    %c0_14 = arith.constant 0 : index
    %c0_15 = arith.constant 0 : index
    %c0_16 = arith.constant 0 : index
    %44 = vector.load %arg7[%c0_14, %c0_15, %c0_16] : memref<1x8x128xf32, #tpu.memory_space<vmem>>, vector<1x8x128xf32>
    tpu.vector_store %arg7[%c0_14, %c0_15, %c0_16], %43 {strides = array<i32>} : memref<1x8x128xf32, #tpu.memory_space<vmem>>, vector<1x8x128xf32>,
    return
  }
  func.func @transform_0(%arg0: i32, %arg1: memref<1xi32, #tpu.memory_space<smem>>) -> (i32, i32) {
    %c0_i32 = arith.constant 0 : i32
    %c0_i32_0 = arith.constant 0 : i32
    %c0_i32_1 = arith.constant 0 : i32
    return %c0_i32, %c0_i32_0 : i32, i32
  }
  func.func @transform_1(%arg0: i32, %arg1: memref<1xi32, #tpu.memory_space<smem>>) -> (i32, i32) {
    %c0_i32 = arith.constant 0 : i32
    %c0_i32_0 = arith.constant 0 : i32
    %c0_i32_1 = arith.constant 0 : i32
    return %c0_i32, %c0_i32_0 : i32, i32
  }
  func.func @transform_2(%arg0: i32, %arg1: memref<1xi32, #tpu.memory_space<smem>>) -> (i32, i32) {
    %c0_i32 = arith.constant 0 : i32
    %c0_i32_0 = arith.constant 0 : i32
    %c0_i32_1 = arith.constant 0 : i32
    return %c0_i32, %c0_i32_0 : i32, i32
  }
  func.func @transform_3(%arg0: i32, %arg1: memref<1xi32, #tpu.memory_space<smem>>) -> (i32, i32) {
    %c0_i32 = arith.constant 0 : i32
    %c0_i32_0 = arith.constant 0 : i32
    %c0_i32_1 = arith.constant 0 : i32
    return %c0_i32, %c0_i32_0 : i32, i32
  }
  func.func @transform_4(%arg0: i32, %arg1: memref<1xi32, #tpu.memory_space<smem>>) -> (i32, i32) {
    %c0_i32 = arith.constant 0 : i32
    %c0_i32_0 = arith.constant 0 : i32
    %c0_i32_1 = arith.constant 0 : i32
    return %c0_i32, %c0_i32_0 : i32, i32
  }
  func.func @transform_5(%arg0: i32, %arg1: memref<1xi32, #tpu.memory_space<smem>>) -> (i32, i32, i32) {
    %c0_i32 = arith.constant 0 : i32
    %c0_i32_0 = arith.constant 0 : i32
    %c0_i32_1 = arith.constant 0 : i32
    return %arg0, %c0_i32, %c0_i32_0 : i32, i32, i32
  }
}

</mosaic_0001>

<llo_original>
// kernel: bayesian_module_forward.1
$region0: #{bayesian_module_forward.1}
  #allocation0 [shape = 'u32[]', space=smem, size = 0x4, offset = 0x4, fixed_abs, tag = 'smem constant byte address 0x4 - core index']
  #allocation1 [shape = 'u32[144,128]{1,0:T(1,128)}', space=vmem, size = 0x12000, scoped, tag = 'internal scratch']
  #allocation2 [shape = 's32[1]{0}', space=sflag, size = 0x4, scoped, tag = 'scoped memory for bayesian_module_forward.1']
  #allocation3 [shape = 's32[1]{0:T(128)S(6)}', space=smem, size = 0x200, scoped, tag = 'prefetched SMEM operand 0']
  %s0 = inlined_call_operand.<no memory space> [shape: s32[1], index: 0, kind: input, shape index: {}]
  %s1 = inlined_call_operand.vmem [shape: bf16[8,128], index: 1, kind: input, shape index: {}]
  %s2 = inlined_call_operand.hbm [shape: bf16[128,128], index: 2, kind: input, shape index: {}]
  %s3 = inlined_call_operand.vmem [shape: f32[1,128], index: 3, kind: input, shape index: {}]
  %s4 = inlined_call_operand.hbm [shape: bf16[128,128], index: 4, kind: input, shape index: {}]
  %s5 = inlined_call_operand.vmem [shape: f32[1,128], index: 5, kind: input, shape index: {}]
  %s6 = inlined_call_operand.hbm [shape: f32[4,8,128], index: 6, kind: output, shape index: {}]
  %s7 = sld [smem:[#allocation0]]
  $region61: #{bayesian_module_forward.1} parent=0
    _
  %s9 = ssub.s32 1, %s7
  %s10 = scalar_select 0, %s9, %s7
  %11 = sst [smem:[#allocation3]] %s0
  $region1: #{bayesian_module_forward.1} parent=0
    #allocation4 [shape = 'u8[32768]{0}', space=vmem, size = 0x8000, scoped, tag = 'input window, operand 2, single buffered']
    #allocation5 [shape = 's32[2]{0}', space=sflag, size = 0x8, scoped, tag = 'scoped memory for bayesian_module_forward.1']
    #allocation6 [shape = 's32[2]{0}', space=sflag, size = 0x8, scoped, tag = 'scoped memory for bayesian_module_forward.1']
    #allocation7 [shape = 'u8[32768]{0}', space=vmem, size = 0x8000, scoped, tag = 'input window, operand 4, single buffered']
    #allocation8 [shape = 's32[1]{0}', space=sflag, size = 0x4, scoped, tag = 'scoped memory for bayesian_module_forward.1']
    #allocation9 [shape = 'u8[8192]{0}', space=vmem, size = 0x2000, scoped, tag = 'output window, operand 0']
    %12 = vsyncpa [#allocation5], 0
    %13 = vsyncpa [#allocation8], 0
    %14 = vsyncpa [#allocation6], 0
    %s15 = scalar_lea.sflag [#allocation6], 1
    %16 = vsyncpa %s15, 0
    loop: start=0, step=1, limit=6
    $region2: #{bayesian_module_forward.1} parent=1 // loop_pre_header
      _
    $region3: #{bayesian_module_forward.1} parent=1 // loop_header
      %s18 = sphi 0, %s22
      %p19 = scmp.ge.s32.totalorder %s18, 6
      %s26 = sphi 0, %s26
      %s28 = sphi 0, %s26
      %s29 = sphi 0, %s28
      %s43 = sphi 0, %s29
      %s47 = sphi 0, %s47
      %s49 = sphi 0, %s47
      %s50 = sphi 0, %s49
      %s64 = sphi 0, %s50
      %s68 = sphi 0, %s68
      %s70 = sphi 0, %s68
      %s71 = sphi 0, %s70
      %s85 = sphi 0, %s71
      %s89 = sphi 0, %s89
      %s91 = sphi 0, %s89
      %s92 = sphi 0, %s91
      %s106 = sphi 0, %s92
      %s110 = sphi 0, %s110
      %s112 = sphi 0, %s110
      %s113 = sphi 0, %s112
      %s127 = sphi 0, %s113
      %s133 = sphi 0, %s135
      %s136 = sphi 0, %s133
      %s137 = sphi 0, %s136
      %s153 = sphi 0, %s137
    $region4: #{bayesian_module_forward.1} parent=1 // loop_header_branch
      %21 = sbr.rel (%p19) target = $region8
    $region5: #{bayesian_module_forward.1} parent=1 // loop_body
      %s23 = ssub.s32 %s18, 1
      %s24 = ssub.s32 %s18, 2
      %s25 = sadd.s32 %s18, 1
      %s27 = sadd.s32 %s26, 1
      %p30 = scmp.eq.s32.totalorder %s18, 3
      %p31 = scmp.ne.s32.totalorder %s26, %s28
      %p32 = scmp.eq.s32.totalorder %s18, 0
      %p33 = por %p31, %p32
      %p34 = scmp.ne.s32.totalorder %s26, %s28
      %p35 = scmp.eq.s32.totalorder %s23, 3
      %p36 = por %p34, %p35
      %p37 = scmp.ne.s32.totalorder %s28, %s29
      %p38 = scmp.eq.s32.totalorder %s23, 0
      %p39 = por %p37, %p38
      %p40 = scmp.ne.s32.totalorder %s28, %s29
      %p41 = scmp.eq.s32.totalorder %s24, 3
      %p42 = por %p40, %p41
      %p44 = scmp.ne.s32.totalorder %s29, %s43
      %p45 = scmp.eq.s32.totalorder %s24, 0
      %p46 = por %p44, %p45
      %s48 = sadd.s32 %s47, 1
      %p51 = scmp.eq.s32.totalorder %s18, 3
      %p52 = scmp.ne.s32.totalorder %s47, %s49
      %p53 = scmp.eq.s32.totalorder %s18, 0
      %p54 = por %p52, %p53
      %p55 = scmp.ne.s32.totalorder %s47, %s49
      %p56 = scmp.eq.s32.totalorder %s23, 3
      %p57 = por %p55, %p56
      %p58 = scmp.ne.s32.totalorder %s49, %s50
      %p59 = scmp.eq.s32.totalorder %s23, 0
      %p60 = por %p58, %p59
      %p61 = scmp.ne.s32.totalorder %s49, %s50
      %p62 = scmp.eq.s32.totalorder %s24, 3
      %p63 = por %p61, %p62
      %p65 = scmp.ne.s32.totalorder %s50, %s64
      %p66 = scmp.eq.s32.totalorder %s24, 0
      %p67 = por %p65, %p66
      %s69 = sadd.s32 %s68, 1
      %p72 = scmp.eq.s32.totalorder %s18, 3
      %p73 = scmp.ne.s32.totalorder %s68, %s70
      %p74 = scmp.eq.s32.totalorder %s18, 0
      %p75 = por %p73, %p74
      %p76 = scmp.ne.s32.totalorder %s68, %s70
      %p77 = scmp.eq.s32.totalorder %s23, 3
      %p78 = por %p76, %p77
      %p79 = scmp.ne.s32.totalorder %s70, %s71
      %p80 = scmp.eq.s32.totalorder %s23, 0
      %p81 = por %p79, %p80
      %p82 = scmp.ne.s32.totalorder %s70, %s71
      %p83 = scmp.eq.s32.totalorder %s24, 3
      %p84 = por %p82, %p83
      %p86 = scmp.ne.s32.totalorder %s71, %s85
      %p87 = scmp.eq.s32.totalorder %s24, 0
      %p88 = por %p86, %p87
      %s90 = sadd.s32 %s89, 1
      %p93 = scmp.eq.s32.totalorder %s18, 3
      %p94 = scmp.ne.s32.totalorder %s89, %s91
      %p95 = scmp.eq.s32.totalorder %s18, 0
      %p96 = por %p94, %p95
      %p97 = scmp.ne.s32.totalorder %s89, %s91
      %p98 = scmp.eq.s32.totalorder %s23, 3
      %p99 = por %p97, %p98
      %p100 = scmp.ne.s32.totalorder %s91, %s92
      %p101 = scmp.eq.s32.totalorder %s23, 0
      %p102 = por %p100, %p101
      %p103 = scmp.ne.s32.totalorder %s91, %s92
      %p104 = scmp.eq.s32.totalorder %s24, 3
      %p105 = por %p103, %p104
      %p107 = scmp.ne.s32.totalorder %s92, %s106
      %p108 = scmp.eq.s32.totalorder %s24, 0
      %p109 = por %p107, %p108
      %s111 = sadd.s32 %s110, 1
      %p114 = scmp.eq.s32.totalorder %s18, 3
      %p115 = scmp.ne.s32.totalorder %s110, %s112
      %p116 = scmp.eq.s32.totalorder %s18, 0
      %p117 = por %p115, %p116
      %p118 = scmp.ne.s32.totalorder %s110, %s112
      %p119 = scmp.eq.s32.totalorder %s23, 3
      %p120 = por %p118, %p119
      %p121 = scmp.ne.s32.totalorder %s112, %s113
      %p122 = scmp.eq.s32.totalorder %s23, 0
      %p123 = por %p121, %p122
      %p124 = scmp.ne.s32.totalorder %s112, %s113
      %p125 = scmp.eq.s32.totalorder %s24, 3
      %p126 = por %p124, %p125
      %p128 = scmp.ne.s32.totalorder %s113, %s127
      %p129 = scmp.eq.s32.totalorder %s24, 0
      %p130 = por %p128, %p129
      %s131 = ssub.s32 %s18, %s25
      %p132 = scmp.eq.s32.totalorder %s131, 0
      %s134 = sadd.s32 %s133, 1
      %s135 = scalar_select %p132, %s133, %s134
      %p138 = pneg %p132
      %p139 = scmp.eq.s32.totalorder %s18, 3
      %p140 = por %p138, %p139
      %p141 = scmp.ne.s32.totalorder %s133, %s136
      %p142 = scmp.eq.s32.totalorder %s18, 0
      %p143 = por %p141, %p142
      %p144 = scmp.ne.s32.totalorder %s133, %s136
      %p145 = scmp.eq.s32.totalorder %s23, 3
      %p146 = por %p144, %p145
      %p147 = scmp.ne.s32.totalorder %s136, %s137
      %p148 = scmp.eq.s32.totalorder %s23, 0
      %p149 = por %p147, %p148
      %p150 = scmp.ne.s32.totalorder %s136, %s137
      %p151 = scmp.eq.s32.totalorder %s24, 3
      %p152 = por %p150, %p151
      %p154 = scmp.ne.s32.totalorder %s137, %s153
      %p155 = scmp.eq.s32.totalorder %s24, 0
      %p156 = por %p154, %p155
      %p157 = scmp.le.s32.totalorder 1, %s18
      %p158 = scmp.lt.s32.totalorder %s18, 5
      %p159 = pnand %p157, %p158
      %p160 = pneg %p159
      // Predicated region
      $region9: #{bayesian_module_forward.1} parent=5 // pred_check
        _
      $region10: #{bayesian_module_forward.1} parent=5 // pred_check_branch
        %162 = sbr.rel (%p159) target = $region12
      $region11: #{bayesian_module_forward.1} parent=5 // pred_region
        %s163 = ssub.s32 %s18, 1
        // Predicated region
        $region13: #{bayesian_module_forward.1} parent=11 // pred_check
          %p164 = pneg %p39
        $region14: #{bayesian_module_forward.1} parent=11 // pred_check_branch
          %166 = sbr.rel (%p164) target = $region16
        $region15: #{bayesian_module_forward.1} parent=11 // pred_region
          _
        $region16: #{bayesian_module_forward.1} parent=11 // pred_fallthru
          _
        // Predicated region
        $region17: #{bayesian_module_forward.1} parent=11 // pred_check
          %p167 = pneg %p60
        $region18: #{bayesian_module_forward.1} parent=11 // pred_check_branch
          %169 = sbr.rel (%p167) target = $region20
        $region19: #{bayesian_module_forward.1} parent=11 // pred_region
          %s171 = ssub.s32 1024, 1024
          %172 = vsyncadd [#allocation5], %s171
          %s173 = sshll.u32 [#allocation4], 4
          %s174 = int_to_ptr.vmem [resolvable:$true] %s173
          %179 = dma.hbm_to_vmem [thread:$0]  %s2, 1024, %s174, [#allocation5], 64, 64, 4
        $region20: #{bayesian_module_forward.1} parent=11 // pred_fallthru
          _
        // Predicated region
        $region21: #{bayesian_module_forward.1} parent=11 // pred_check
          %p180 = pneg %p81
        $region22: #{bayesian_module_forward.1} parent=11 // pred_check_branch
          %182 = sbr.rel (%p180) target = $region24
        $region23: #{bayesian_module_forward.1} parent=11 // pred_region
          _
        $region24: #{bayesian_module_forward.1} parent=11 // pred_fallthru
          _
        // Predicated region
        $region25: #{bayesian_module_forward.1} parent=11 // pred_check
          %p183 = pneg %p102
        $region26: #{bayesian_module_forward.1} parent=11 // pred_check_branch
          %185 = sbr.rel (%p183) target = $region28
        $region27: #{bayesian_module_forward.1} parent=11 // pred_region
          %s187 = ssub.s32 1024, 1024
          %188 = vsyncadd [#allocation8], %s187
          %s189 = sshll.u32 [#allocation7], 4
          %s190 = int_to_ptr.vmem [resolvable:$true] %s189
          %195 = dma.hbm_to_vmem [thread:$0]  %s4, 1024, %s190, [#allocation8], 64, 64, 4
        $region28: #{bayesian_module_forward.1} parent=11 // pred_fallthru
          _
        // Predicated region
        $region29: #{bayesian_module_forward.1} parent=11 // pred_check
          %p196 = pneg %p123
        $region30: #{bayesian_module_forward.1} parent=11 // pred_check_branch
          %198 = sbr.rel (%p196) target = $region32
        $region31: #{bayesian_module_forward.1} parent=11 // pred_region
          _
        $region32: #{bayesian_module_forward.1} parent=11 // pred_fallthru
          _
      $region12: #{bayesian_module_forward.1} parent=5 // pred_fallthru
        _
      %p199 = scmp.lt.s32.totalorder %s18, 4
      // Predicated region
      $region33: #{bayesian_module_forward.1} parent=5 // pred_check
        %p200 = pneg %p199
      $region34: #{bayesian_module_forward.1} parent=5 // pred_check_branch
        %202 = sbr.rel (%p200) target = $region36
      $region35: #{bayesian_module_forward.1} parent=5 // pred_region
        _
      $region36: #{bayesian_module_forward.1} parent=5 // pred_fallthru
        _
      %p203 = scmp.le.s32.totalorder 1, %s18
      %p204 = scmp.lt.s32.totalorder %s18, 5
      %p205 = pnand %p203, %p204
      %p206 = pneg %p205
      // Predicated region
      $region37: #{bayesian_module_forward.1} parent=5 // pred_check
        _
      $region38: #{bayesian_module_forward.1} parent=5 // pred_check_branch
        %208 = sbr.rel (%p205) target = $region40
      $region39: #{bayesian_module_forward.1} parent=5 // pred_region
        %s209 = ssub.s32 %s18, 1
        // Predicated region
        $region41: #{bayesian_module_forward.1} parent=39 // pred_check
          %p210 = pneg %p60
        $region42: #{bayesian_module_forward.1} parent=39 // pred_check_branch
          %212 = sbr.rel (%p210) target = $region44
        $region43: #{bayesian_module_forward.1} parent=39 // pred_region
          %213 = dma.done [#allocation5], 1024
        $region44: #{bayesian_module_forward.1} parent=39 // pred_fallthru
          _
        // Predicated region
        $region45: #{bayesian_module_forward.1} parent=39 // pred_check
          %p214 = pneg %p102
        $region46: #{bayesian_module_forward.1} parent=39 // pred_check_branch
          %216 = sbr.rel (%p214) target = $region48
        $region47: #{bayesian_module_forward.1} parent=39 // pred_region
          %217 = dma.done [#allocation8], 1024
        $region48: #{bayesian_module_forward.1} parent=39 // pred_fallthru
          _
        %p218 = pneg %p39
        %p219 = pneg %p36
        %p220 = pneg %p60
        %p221 = pneg %p57
        %p222 = pneg %p81
        %p223 = pneg %p78
        %p224 = pneg %p102
        %p225 = pneg %p99
        %p226 = pneg %p123
        %p227 = pneg %p120
        %p228 = pneg %p149
        %p229 = pneg %p146
        %s230 = sand.u32 %s136, 1
        %s231 = scalar_lea.sflag [#allocation6], %s230
        %s232 = sand.u32 %s136, 1
        %s233 = smul.addr %s232, 8
        %s234 = scalar_lea.vmem [#allocation9], %s233
        %v236 = vld [vmem:[%s1] sm:$0xf]
        %v237 = vld [vmem:[#allocation4] sm:$0xf]
        %v238 = vld [vmem:[#allocation4 + $0x4] sm:$0xf]
        %v239 = vld [vmem:[#allocation4 + $0x8] sm:$0xf]
        %v240 = vld [vmem:[#allocation4 + $0xc] sm:$0xf]
        %v241 = vld [vmem:[#allocation4 + $0x10] sm:$0xf]
        %v242 = vld [vmem:[#allocation4 + $0x14] sm:$0xf]
        %v243 = vld [vmem:[#allocation4 + $0x18] sm:$0xf]
        %v244 = vld [vmem:[#allocation4 + $0x1c] sm:$0xf]
        %v245 = vld [vmem:[#allocation4 + $0x20] sm:$0xf]
        %v246 = vld [vmem:[#allocation4 + $0x24] sm:$0xf]
        %v247 = vld [vmem:[#allocation4 + $0x28] sm:$0xf]
        %v248 = vld [vmem:[#allocation4 + $0x2c] sm:$0xf]
        %v249 = vld [vmem:[#allocation4 + $0x30] sm:$0xf]
        %v250 = vld [vmem:[#allocation4 + $0x34] sm:$0xf]
        %v251 = vld [vmem:[#allocation4 + $0x38] sm:$0xf]
        %v252 = vld [vmem:[#allocation4 + $0x3c] sm:$0xf]
        %v253 = vld [vmem:[%s3] sm:$0x1]
        %v255 = vlaneseq
        %v256 = vshrl.u32 %v255, 7
        %v257 = vsub.s32 0, %v256
        %v258 = vrot.slane %v253, %v257
        %v276 = vunpack.c.l.b16 %v237
        %v277 = vunpack.c.l.b16 %v238
        %v278 = vunpack.c.l.b16 %v239
        %v279 = vunpack.c.l.b16 %v240
        %v280 = vunpack.c.l.b16 %v241
        %v281 = vunpack.c.l.b16 %v242
        %v282 = vunpack.c.l.b16 %v243
        %v283 = vunpack.c.l.b16 %v244
        %v284 = vunpack.c.l.b16 %v245
        %v285 = vunpack.c.l.b16 %v246
        %v286 = vunpack.c.l.b16 %v247
        %v287 = vunpack.c.l.b16 %v248
        %v288 = vunpack.c.l.b16 %v249
        %v289 = vunpack.c.l.b16 %v250
        %v290 = vunpack.c.l.b16 %v251
        %v291 = vunpack.c.l.b16 %v252
        %v292 = vpack.c.b16 %v277, %v276
        %v293 = vpack.c.b16 %v279, %v278
        %v294 = vpack.c.b16 %v281, %v280
        %v295 = vpack.c.b16 %v283, %v282
        %v296 = vpack.c.b16 %v285, %v284
        %v297 = vpack.c.b16 %v287, %v286
        %v298 = vpack.c.b16 %v289, %v288
        %v299 = vpack.c.b16 %v291, %v290
        %308 = vmatprep.subr.bf16.mxu0 0
        %309 = vmatpush1.bf16.msra.mxu0 %v292
        %310 = vmatprep.subr.bf16.mxu0 0
        %311 = vmatpush1.bf16.msra.mxu0 %v293
        %312 = vmatprep.subr.bf16.mxu0 0
        %313 = vmatpush1.bf16.msra.mxu0 %v294
        %314 = vmatprep.subr.bf16.mxu0 0
        %315 = vmatpush1.bf16.msra.mxu0 %v295
        %316 = vmatprep.subr.bf16.mxu0 0
        %317 = vmatpush1.bf16.msra.mxu0 %v296
        %318 = vmatprep.subr.bf16.mxu0 0
        %319 = vmatpush1.bf16.msra.mxu0 %v297
        %320 = vmatprep.subr.bf16.mxu0 0
        %321 = vmatpush1.bf16.msra.mxu0 %v298
        %322 = vmatprep.subr.bf16.mxu0 0
        %323 = vmatpush1.bf16.msra.mxu0 %v299
        %324 = vmatprep.subr.bf16.mxu0 0
        %325 = vmatpush1.bf16.msra.mxu0 0
        %326 = vmatprep.subr.bf16.mxu0 0
        %327 = vmatpush1.bf16.msra.mxu0 0
        %328 = vmatprep.subr.bf16.mxu0 0
        %329 = vmatpush1.bf16.msra.mxu0 0
        %330 = vmatprep.subr.bf16.mxu0 0
        %331 = vmatpush1.bf16.msra.mxu0 0
        %332 = vmatprep.subr.bf16.mxu0 0
        %333 = vmatpush1.bf16.msra.mxu0 0
        %334 = vmatprep.subr.bf16.mxu0 0
        %335 = vmatpush1.bf16.msra.mxu0 0
        %336 = vmatprep.subr.bf16.mxu0 0
        %337 = vmatpush1.bf16.msra.mxu0 0
        %338 = vmatprep.subr.bf16.mxu0 0
        %339 = vmatpush1.bf16.msra.mxu0 0
        %340 = vmatprep.mubr.bf16.mxu0 0
        %341 = vmatmul.mubr.bf16.gmra.mrb[0].mxu0 %v236
        %v342 = vpop.f32.mrb[0].mxu0
        %v343 = vadd.f32 %v258, %v342
        %v344 = vpop.f32.mrb[0].mxu0
        %v345 = vpop.f32.mrb[0].mxu0
        %v346 = vpop.f32.mrb[0].mxu0
        %347 = vdwg.mxu0
        %v348 = vmax.f32 %v343, 0.0
        %s349 = sld [smem:[#allocation3]]
        %v350 = vlaneseq
        %v351 = vshrl.u32 %v350, 7
        %v352 = vlaneseq
        %v353 = vand.u32 %v352, 127
        %v354 = vmul.u32 %v351, 128
        %v355 = vadd.s32 %v354, %v353
        %s356 = smul.u32 %s23, 2246822507
        %v357 = vstv %s356
        %v358 = vadd.s32 %v355, %v357
        %s359 = smul.u32 %s349, 2654435769
        %v360 = vstv %s359
        %v361 = vadd.s32 %v358, %v360
        %v362 = vshrl.u32 %v361, 16
        %v363 = vxor.u32 %v361, %v362
        %v364 = vmul.u32 %v363, 2146121005
        %v365 = vshrl.u32 %v364, 15
        %v366 = vxor.u32 %v364, %v365
        %v367 = vmul.u32 %v366, 2221713035
        %v368 = vshrl.u32 %v367, 16
        %v369 = vxor.u32 %v367, %v368
        %vm370 = vcmp.lt.u32.totalorder %v369, 2147483648
        %v371 = vsel %vm370, %v348, 0.0
        %v372 = vpack.c.bf16 %v371, %v371
        %v373 = vld [vmem:[#allocation7] sm:$0xf]
        %v374 = vld [vmem:[#allocation7 + $0x4] sm:$0xf]
        %v375 = vld [vmem:[#allocation7 + $0x8] sm:$0xf]
        %v376 = vld [vmem:[#allocation7 + $0xc] sm:$0xf]
        %v377 = vld [vmem:[#allocation7 + $0x10] sm:$0xf]
        %v378 = vld [vmem:[#allocation7 + $0x14] sm:$0xf]
        %v379 = vld [vmem:[#allocation7 + $0x18] sm:$0xf]
        %v380 = vld [vmem:[#allocation7 + $0x1c] sm:$0xf]
        %v381 = vld [vmem:[#allocation7 + $0x20] sm:$0xf]
        %v382 = vld [vmem:[#allocation7 + $0x24] sm:$0xf]
        %v383 = vld [vmem:[#allocation7 + $0x28] sm:$0xf]
        %v384 = vld [vmem:[#allocation7 + $0x2c] sm:$0xf]
        %v385 = vld [vmem:[#allocation7 + $0x30] sm:$0xf]
        %v386 = vld [vmem:[#allocation7 + $0x34] sm:$0xf]
        %v387 = vld [vmem:[#allocation7 + $0x38] sm:$0xf]
        %v388 = vld [vmem:[#allocation7 + $0x3c] sm:$0xf]
        %v389 = vld [vmem:[%s5] sm:$0x1]
        %v391 = vlaneseq
        %v392 = vshrl.u32 %v391, 7
        %v393 = vsub.s32 0, %v392
        %v394 = vrot.slane %v389, %v393
        %v412 = vunpack.c.l.b16 %v373
        %v413 = vunpack.c.l.b16 %v374
        %v414 = vunpack.c.l.b16 %v375
        %v415 = vunpack.c.l.b16 %v376
        %v416 = vunpack.c.l.b16 %v377
        %v417 = vunpack.c.l.b16 %v378
        %v418 = vunpack.c.l.b16 %v379
        %v419 = vunpack.c.l.b16 %v380
        %v420 = vunpack.c.l.b16 %v381
        %v421 = vunpack.c.l.b16 %v382
        %v422 = vunpack.c.l.b16 %v383
        %v423 = vunpack.c.l.b16 %v384
        %v424 = vunpack.c.l.b16 %v385
        %v425 = vunpack.c.l.b16 %v386
        %v426 = vunpack.c.l.b16 %v387
        %v427 = vunpack.c.l.b16 %v388
        %v428 = vpack.c.b16 %v413, %v412
        %v429 = vpack.c.b16 %v415, %v414
        %v430 = vpack.c.b16 %v417, %v416
        %v431 = vpack.c.b16 %v419, %v418
        %v432 = vpack.c.b16 %v421, %v420
        %v433 = vpack.c.b16 %v423, %v422
        %v434 = vpack.c.b16 %v425, %v424
        %v435 = vpack.c.b16 %v427, %v426
        %444 = vmatprep.subr.bf16.mxu0 0
        %445 = vmatpush1.bf16.msra.mxu0 %v428
        %446 = vmatprep.subr.bf16.mxu0 0
        %447 = vmatpush1.bf16.msra.mxu0 %v429
        %448 = vmatprep.subr.bf16.mxu0 0
        %449 = vmatpush1.bf16.msra.mxu0 %v430
        %450 = vmatprep.subr.bf16.mxu0 0
        %451 = vmatpush1.bf16.msra.mxu0 %v431
        %452 = vmatprep.subr.bf16.mxu0 0
        %453 = vmatpush1.bf16.msra.mxu0 %v432
        %454 = vmatprep.subr.bf16.mxu0 0
        %455 = vmatpush1.bf16.msra.mxu0 %v433
        %456 = vmatprep.subr.bf16.mxu0 0
        %457 = vmatpush1.bf16.msra.mxu0 %v434
        %458 = vmatprep.subr.bf16.mxu0 0
        %459 = vmatpush1.bf16.msra.mxu0 %v435
        %460 = vmatprep.subr.bf16.mxu0 0
        %461 = vmatpush1.bf16.msra.mxu0 0
        %462 = vmatprep.subr.bf16.mxu0 0
        %463 = vmatpush1.bf16.msra.mxu0 0
        %464 = vmatprep.subr.bf16.mxu0 0
        %465 = vmatpush1.bf16.msra.mxu0 0
        %466 = vmatprep.subr.bf16.mxu0 0
        %467 = vmatpush1.bf16.msra.mxu0 0
        %468 = vmatprep.subr.bf16.mxu0 0
        %469 = vmatpush1.bf16.msra.mxu0 0
        %470 = vmatprep.subr.bf16.mxu0 0
        %471 = vmatpush1.bf16.msra.mxu0 0
        %472 = vmatprep.subr.bf16.mxu0 0
        %473 = vmatpush1.bf16.msra.mxu0 0
        %474 = vmatprep.subr.bf16.mxu0 0
        %475 = vmatpush1.bf16.msra.mxu0 0
        %476 = vmatprep.mubr.bf16.mxu0 0
        %477 = vmatmul.mubr.bf16.gmra.mrb[0].mxu0 %v372
        %v478 = vpop.f32.mrb[0].mxu0
        %v479 = vadd.f32 %v394, %v478
        %v480 = vpop.f32.mrb[0].mxu0
        %v481 = vpop.f32.mrb[0].mxu0
        %v482 = vpop.f32.mrb[0].mxu0
        %483 = vdwg.mxu0
        %484 = vst [vmem:[%s234] sm:$0xff] %v479
        %s485 = sand.u32 %s136, 1
        %s486 = scalar_lea.sflag [#allocation6], %s485
        %s487 = sand.u32 %s136, 1
        %s488 = smul.addr %s487, 8
        %s489 = scalar_lea.vmem [#allocation9], %s488
        // Predicated region
        $region49: #{bayesian_module_forward.1} parent=39 // pred_check
          %p490 = pneg %p146
        $region50: #{bayesian_module_forward.1} parent=39 // pred_check_branch
          %492 = sbr.rel (%p490) target = $region52
        $region51: #{bayesian_module_forward.1} parent=39 // pred_region
          %s494 = ssub.s32 128, 128
          %495 = vsyncadd %s486, %s494
          %s496 = smul.addr %s23, 128
          %s497 = scalar_lea.hbm %s6, %s496
          %s499 = sshll.u32 %s489, 4
          %s500 = int_to_ptr.vmem [resolvable:$true] %s499
          %502 = dma.vmem_to_hbm [thread:$0]  %s500, 128, %s497, %s486
        $region52: #{bayesian_module_forward.1} parent=39 // pred_fallthru
          _
      $region40: #{bayesian_module_forward.1} parent=5 // pred_fallthru
        _
      %p503 = scmp.le.s32.totalorder 2, %s18
      // Predicated region
      $region53: #{bayesian_module_forward.1} parent=5 // pred_check
        %p504 = pneg %p503
      $region54: #{bayesian_module_forward.1} parent=5 // pred_check_branch
        %506 = sbr.rel (%p504) target = $region56
      $region55: #{bayesian_module_forward.1} parent=5 // pred_region
        %s507 = ssub.s32 %s18, 2
        // Predicated region
        $region57: #{bayesian_module_forward.1} parent=55 // pred_check
          %p508 = pneg %p152
        $region58: #{bayesian_module_forward.1} parent=55 // pred_check_branch
          %510 = sbr.rel (%p508) target = $region60
        $region59: #{bayesian_module_forward.1} parent=55 // pred_region
          %s511 = sand.u32 %s137, 1
          %s512 = scalar_lea.sflag [#allocation6], %s511
          %s513 = sand.u32 %s137, 1
          %s514 = smul.addr %s513, 8
          %s515 = scalar_lea.vmem [#allocation9], %s514
          %516 = dma.done %s512, 128
        $region60: #{bayesian_module_forward.1} parent=55 // pred_fallthru
          _
      $region56: #{bayesian_module_forward.1} parent=5 // pred_fallthru
        _
    $region6: #{bayesian_module_forward.1} parent=1 // loop_footer
      %s22 = sadd.s32 1, %s18
    $region7: #{bayesian_module_forward.1} parent=1 // loop_footer_branch
      %17 = sbr.rel target = $region3
    $region8: #{bayesian_module_forward.1} parent=1 // loop_exit
      _
    %517 = vsyncpa [#allocation5], 1
    %s518 = scalar_lea.sflag [#allocation5], 1
    %519 = vsyncpa %s518, 1
    %520 = vsyncpa [#allocation8], 1
    %521 = vsyncpa [#allocation6], 1
    %s522 = scalar_lea.sflag [#allocation6], 1
    %523 = vsyncpa %s522, 1

</llo_original>
